<compile_context>
chip_gen: v7x
topology: tpu7x:2x2x1
jax: 0.10.0
libtpu: 0.0.40
codegen_flags: <defaults>
</compile_context>

<pallas_src>
import jax
import jax.numpy as jnp
from jax import lax
from jax.experimental import pallas as pl
from jax.experimental.pallas import tpu as pltpu

FEAT = 20       # nn.Linear(20, 20) and rand_weight (20, 20)
TM_MAX = 1024   # row tile cap: (TM,20) f32 pads to TM*128*4 B = 512 KiB/buffer


def fancy_mlp_kernel(nrows_ref, x_ref, wt_ref, b_ref, rw_ref, part_ref):
    # nrows_ref: SMEM (1,) int32, number of valid (un-padded) rows
    # x_ref:  (TM, 20)   current batch tile
    # wt_ref: (20, 20)   Linear weight transposed (resident)
    # b_ref:  (1, 20)    Linear bias (resident)
    # rw_ref: (20, 20)   fixed random weight (resident)
    # part_ref: (1, 8, 128) per-tile partials; [0,0,0]=sum, [0,1,0]=sum of squares
    x = x_ref[...]
    wt = wt_ref[...]
    b = b_ref[...]
    rw = rw_ref[...]

    # x = self.linear(x)
    h = jnp.dot(x, wt, preferred_element_type=jnp.float32) + b
    # x = relu(x @ rand_weight + 1)
    h = jnp.maximum(jnp.dot(h, rw, preferred_element_type=jnp.float32) + 1.0, 0.0)
    # x = self.linear(x)   (same shared Linear layer)
    h = jnp.dot(h, wt, preferred_element_type=jnp.float32) + b

    # mask out zero-padded rows (they pick up the bias, so they are NOT zero)
    tm = x.shape[0]
    row = lax.broadcasted_iota(jnp.int32, h.shape, 0) + pl.program_id(0) * tm
    h = jnp.where(row < nrows_ref[0], h, 0.0)

    s = jnp.sum(h)
    ss = jnp.sum(h * h)

    # lane-dense partials writeback: sublane 0 carries sum, sublane 1 carries sumsq
    sub = lax.broadcasted_iota(jnp.int32, (8, 128), 0)
    part_ref[0] = jnp.where(sub == 0, s, jnp.where(sub == 1, ss, 0.0))


def fancy_mlp_forward(x, w, b, rand_w):
    n = x.shape[0]
    wt = w.T                      # (in, out) so the kernel does x @ W.T + b
    b2 = b.reshape(1, FEAT)

    # pad the batch to a multiple of the tile (>= 8 rows, TM multiple of 8)
    n8 = max(8, -(-n // 8) * 8)
    tm = min(TM_MAX, n8)
    n_pad = -(-n8 // tm) * tm
    if n_pad != n:
        x = jnp.pad(x, ((0, n_pad - n), (0, 0)))
    num_tiles = n_pad // tm

    cost = pl.CostEstimate(
        flops=6 * n_pad * FEAT * FEAT,
        transcendentals=0,
        bytes_accessed=n_pad * FEAT * 4 + 2 * FEAT * FEAT * 4 + FEAT * 4
        + num_tiles * 8 * 128 * 4,
    )

    partials = pl.pallas_call(
        fancy_mlp_kernel,
        out_shape=jax.ShapeDtypeStruct((num_tiles, 8, 128), jnp.float32),
        grid_spec=pltpu.PrefetchScalarGridSpec(
            num_scalar_prefetch=1,
            grid=(num_tiles,),
            in_specs=[
                pl.BlockSpec((tm, FEAT), lambda i, nr: (i, 0)),      # x tile
                pl.BlockSpec((FEAT, FEAT), lambda i, nr: (0, 0)),    # W.T (resident)
                pl.BlockSpec((1, FEAT), lambda i, nr: (0, 0)),       # bias (resident)
                pl.BlockSpec((FEAT, FEAT), lambda i, nr: (0, 0)),    # rand_w (resident)
            ],
            out_specs=pl.BlockSpec((1, 8, 128), lambda i, nr: (i, 0, 0)),
        ),
        compiler_params=pltpu.CompilerParams(
            dimension_semantics=("parallel",),
        ),
        cost_estimate=cost,
    )(jnp.array([n], jnp.int32), x, wt, b2, rand_w)

    total = jnp.sum(partials[:, 0, 0])
    sumsq = jnp.sum(partials[:, 1, 0])
    norm = jnp.sqrt(sumsq)

    # while x.norm() > 1: x /= 2   -> closed-form: k = ceil(log2(norm)) halvings
    k = jnp.where(norm > 1.0, jnp.ceil(jnp.log2(jnp.maximum(norm, 1e-30))), 0.0)
    scale = jnp.exp2(-k)
    # guard the rare log2-rounding off-by-one
    scale = jnp.where(norm * scale > 1.0, scale * 0.5, scale)
    n_final = norm * scale
    # if x.norm() < 0.8: x *= 10
    scale = jnp.where(n_final < 0.8, scale * 10.0, scale)

    # return x.sum()
    return total * scale


if __name__ == "__main__":
    key = jax.random.PRNGKey(0)
    kx, kw, kb, kr = jax.random.split(key, 4)

    batch = 2
    x = jax.random.uniform(kx, (batch, FEAT), dtype=jnp.float32)

    # Deterministic parameter init (same shapes as the torch module):
    # nn.Linear(20, 20): U(-1/sqrt(20), 1/sqrt(20)) for weight & bias,
    # rand_weight: torch.rand((20, 20)) -> U[0, 1)
    bound = float(1.0 / (FEAT ** 0.5))
    w = jax.random.uniform(kw, (FEAT, FEAT), minval=-bound, maxval=bound,
                           dtype=jnp.float32)
    b = jax.random.uniform(kb, (FEAT,), minval=-bound, maxval=bound,
                           dtype=jnp.float32)
    rand_w = jax.random.uniform(kr, (FEAT, FEAT), dtype=jnp.float32)

    out = jax.jit(fancy_mlp_forward)(x, w, b, rand_w)
    jax.block_until_ready(out)
    print("KERNEL_OK")
</pallas_src>

<mosaic_0001>
module attributes {stable_mosaic.version = 11 : i64} {
  func.func @fancy_mlp_kernel(%arg0: i32, %arg1: memref<1xi32, #tpu.memory_space<smem>>, %arg2: memref<8x20xf32, #tpu.memory_space<vmem>>, %arg3: memref<20x20xf32, #tpu.memory_space<vmem>>, %arg4: memref<1x20xf32, #tpu.memory_space<vmem>>, %arg5: memref<20x20xf32, #tpu.memory_space<vmem>>, %arg6: memref<1x8x128xf32, #tpu.memory_space<vmem>>) attributes {dimension_semantics = [#tpu.dimension_semantics<parallel>], iteration_bounds = array<i64: 1>, scalar_prefetch = 1 : i64, scratch_operands = 0 : i64, tpu.core_type = #tpu.core_type<tc>, window_params = [{transform_indices = @transform_0, window_bounds = array<i64: 8, 20>}, {pipeline_mode = #tpu.pipeline_mode<synchronous>, transform_indices = @transform_1, window_bounds = array<i64: 20, 20>}, {pipeline_mode = #tpu.pipeline_mode<synchronous>, transform_indices = @transform_2, window_bounds = array<i64: 1, 20>}, {pipeline_mode = #tpu.pipeline_mode<synchronous>, transform_indices = @transform_3, window_bounds = array<i64: 20, 20>}, {transform_indices = @transform_4, window_bounds = array<i64: 1, 8, 128>}]} {
    %c0 = arith.constant 0 : index
    %c0_0 = arith.constant 0 : index
    %0 = vector.load %arg2[%c0, %c0_0] : memref<8x20xf32, #tpu.memory_space<vmem>>, vector<8x20xf32>
    %c0_1 = arith.constant 0 : index
    %c0_2 = arith.constant 0 : index
    %1 = vector.load %arg3[%c0_1, %c0_2] : memref<20x20xf32, #tpu.memory_space<vmem>>, vector<20x20xf32>
    %c0_3 = arith.constant 0 : index
    %c0_4 = arith.constant 0 : index
    %2 = vector.load %arg4[%c0_3, %c0_4] : memref<1x20xf32, #tpu.memory_space<vmem>>, vector<1x20xf32>
    %c0_5 = arith.constant 0 : index
    %c0_6 = arith.constant 0 : index
    %3 = vector.load %arg5[%c0_5, %c0_6] : memref<20x20xf32, #tpu.memory_space<vmem>>, vector<20x20xf32>
    %cst = arith.constant dense<0.000000e+00> : vector<8x20xf32>
    %4 = tpu.matmul %0, %1, %cst {dimension_numbers = #tpu.dot_dimension_numbers<[1], [0], [0], [1], [0, 0, 1, 1], [], []>} : vector<8x20xf32>, vector<20x20xf32>, vector<8x20xf32> -> vector<8x20xf32>
    %5 = vector.broadcast %2 : vector<1x20xf32> to vector<8x20xf32>
    %6 = arith.addf %4, %5 : vector<8x20xf32>
    %cst_7 = arith.constant dense<0.000000e+00> : vector<8x20xf32>
    %7 = tpu.matmul %6, %3, %cst_7 {dimension_numbers = #tpu.dot_dimension_numbers<[1], [0], [0], [1], [0, 0, 1, 1], [], []>} : vector<8x20xf32>, vector<20x20xf32>, vector<8x20xf32> -> vector<8x20xf32>
    %cst_8 = arith.constant 1.000000e+00 : f32
    %8 = vector.broadcast %cst_8 : f32 to vector<8x20xf32>
    %9 = arith.addf %7, %8 : vector<8x20xf32>
    %cst_9 = arith.constant 0.000000e+00 : f32
    %10 = vector.broadcast %cst_9 : f32 to vector<8x20xf32>
    %11 = arith.maximumf %9, %10 : vector<8x20xf32>
    %cst_10 = arith.constant dense<0.000000e+00> : vector<8x20xf32>
    %12 = tpu.matmul %11, %1, %cst_10 {dimension_numbers = #tpu.dot_dimension_numbers<[1], [0], [0], [1], [0, 0, 1, 1], [], []>} : vector<8x20xf32>, vector<20x20xf32>, vector<8x20xf32> -> vector<8x20xf32>
    %13 = vector.broadcast %2 : vector<1x20xf32> to vector<8x20xf32>
    %14 = arith.addf %12, %13 : vector<8x20xf32>
    %15 = tpu.iota {dimensions = array<i32: 0>} : vector<8x20xi32>
    %c8_i32 = arith.constant 8 : i32
    %16 = arith.muli %arg0, %c8_i32 : i32
    %17 = vector.broadcast %16 : i32 to vector<8x20xi32>
    %18 = arith.addi %15, %17 : vector<8x20xi32>
    %c0_11 = arith.constant 0 : index
    %19 = memref.load %arg1[%c0_11] : memref<1xi32, #tpu.memory_space<smem>>
    %20 = vector.broadcast %19 : i32 to vector<8x20xi32>
    %21 = arith.cmpi slt, %18, %20 : vector<8x20xi32>
    %cst_12 = arith.constant 0.000000e+00 : f32
    %22 = vector.broadcast %cst_12 : f32 to vector<8x20xf32>
    %23 = arith.select %21, %14, %22 : vector<8x20xi1>, vector<8x20xf32>
    %24 = vector.shape_cast %23 : vector<8x20xf32> to vector<1x8x20xf32>
    %cst_13 = arith.constant dense<0.000000e+00> : vector<1xf32>
    %25 = vector.multi_reduction <add>, %24, %cst_13 [1, 2] : vector<1x8x20xf32> to vector<1xf32>
    %26 = vector.shape_cast %25 : vector<1xf32> to vector<1x1x1xf32>
    %27 = vector.extract %26[0, 0, 0] : f32 from vector<1x1x1xf32>
    %28 = arith.mulf %23, %23 : vector<8x20xf32>
    %29 = vector.shape_cast %28 : vector<8x20xf32> to vector<1x8x20xf32>
    %cst_14 = arith.constant dense<0.000000e+00> : vector<1xf32>
    %30 = vector.multi_reduction <add>, %29, %cst_14 [1, 2] : vector<1x8x20xf32> to vector<1xf32>
    %31 = vector.shape_cast %30 : vector<1xf32> to vector<1x1x1xf32>
    %32 = vector.extract %31[0, 0, 0] : f32 from vector<1x1x1xf32>
    %33 = tpu.iota {dimensions = array<i32: 0>} : vector<8x128xi32>
    %c0_i32 = arith.constant 0 : i32
    %34 = vector.broadcast %c0_i32 : i32 to vector<8x128xi32>
    %35 = arith.cmpi eq, %33, %34 : vector<8x128xi32>
    %c1_i32 = arith.constant 1 : i32
    %36 = vector.broadcast %c1_i32 : i32 to vector<8x128xi32>
    %37 = arith.cmpi eq, %33, %36 : vector<8x128xi32>
    %cst_15 = arith.constant 0.000000e+00 : f32
    %38 = vector.broadcast %32 : f32 to vector<8x128xf32>
    %39 = vector.broadcast %cst_15 : f32 to vector<8x128xf32>
    %40 = arith.select %37, %38, %39 : vector<8x128xi1>, vector<8x128xf32>
    %41 = vector.broadcast %27 : f32 to vector<8x128xf32>
    %42 = arith.select %35, %41, %40 : vector<8x128xi1>, vector<8x128xf32>
    %c0_16 = arith.constant 0 : index
    %c0_17 = arith.constant 0 : index
    %c0_18 = arith.constant 0 : index
    %43 = vector.load %arg6[%c0_16, %c0_17, %c0_18] : memref<1x8x128xf32, #tpu.memory_space<vmem>>, vector<1x8x128xf32>
    %44 = vector.shape_cast %43 : vector<1x8x128xf32> to vector<8x128xf32>
    %45 = vector.shape_cast %42 : vector<8x128xf32> to vector<1x8x128xf32>
    tpu.vector_store %arg6[%c0_16, %c0_17, %c0_18], %45 {strides = array<i32>} : memref<1x8x128xf32, #tpu.memory_space<vmem>>, vector<1x8x128xf32>,
    return
  }
  func.func @transform_0(%arg0: i32, %arg1: memref<1xi32, #tpu.memory_space<smem>>) -> (i32, i32) {
    %c0_i32 = arith.constant 0 : i32
    %c0_i32_0 = arith.constant 0 : i32
    return %arg0, %c0_i32 : i32, i32
  }
  func.func @transform_1(%arg0: i32, %arg1: memref<1xi32, #tpu.memory_space<smem>>) -> (i32, i32) {
    %c0_i32 = arith.constant 0 : i32
    %c0_i32_0 = arith.constant 0 : i32
    %c0_i32_1 = arith.constant 0 : i32
    return %c0_i32, %c0_i32_0 : i32, i32
  }
  func.func @transform_2(%arg0: i32, %arg1: memref<1xi32, #tpu.memory_space<smem>>) -> (i32, i32) {
    %c0_i32 = arith.constant 0 : i32
    %c0_i32_0 = arith.constant 0 : i32
    %c0_i32_1 = arith.constant 0 : i32
    return %c0_i32, %c0_i32_0 : i32, i32
  }
  func.func @transform_3(%arg0: i32, %arg1: memref<1xi32, #tpu.memory_space<smem>>) -> (i32, i32) {
    %c0_i32 = arith.constant 0 : i32
    %c0_i32_0 = arith.constant 0 : i32
    %c0_i32_1 = arith.constant 0 : i32
    return %c0_i32, %c0_i32_0 : i32, i32
  }
  func.func @transform_4(%arg0: i32, %arg1: memref<1xi32, #tpu.memory_space<smem>>) -> (i32, i32, i32) {
    %c0_i32 = arith.constant 0 : i32
    %c0_i32_0 = arith.constant 0 : i32
    %c0_i32_1 = arith.constant 0 : i32
    return %arg0, %c0_i32, %c0_i32_0 : i32, i32, i32
  }
}

</mosaic_0001>

<llo_original>
// kernel: fancy_mlp_forward.1
$region0: #{fancy_mlp_forward.1}
  #allocation0 [shape = 'u32[]', space=smem, size = 0x4, offset = 0x4, fixed_abs, tag = 'smem constant byte address 0x4 - core index']
  #allocation1 [shape = 'u32[144,128]{1,0:T(1,128)}', space=vmem, size = 0x12000, scoped, tag = 'internal scratch']
  #allocation2 [shape = 's32[1]{0}', space=sflag, size = 0x4, scoped, tag = 'scoped memory for fancy_mlp_forward.1']
  #allocation3 [shape = 's32[1]{0:T(128)S(6)}', space=smem, size = 0x200, scoped, tag = 'prefetched SMEM operand 0']
  %s0 = inlined_call_operand.<no memory space> [shape: s32[1], index: 0, kind: input, shape index: {}]
  %s1 = inlined_call_operand.vmem [shape: f32[8,20], index: 1, kind: input, shape index: {}]
  %s2 = inlined_call_operand.vmem [shape: f32[20,20], index: 2, kind: input, shape index: {}]
  %s3 = inlined_call_operand.vmem [shape: f32[1,20], index: 3, kind: input, shape index: {}]
  %s4 = inlined_call_operand.vmem [shape: f32[20,20], index: 4, kind: input, shape index: {}]
  %s5 = inlined_call_operand.vmem [shape: f32[1,8,128], index: 5, kind: output, shape index: {}]
  %s6 = sld [smem:[#allocation0]]
  $region26: #{fancy_mlp_forward.1} parent=0
    _
  %s8 = ssub.s32 1, %s6
  %s9 = scalar_select 0, %s8, %s6
  %10 = sst [smem:[#allocation3]] %s0
  // Predicated region
  $region2: #{fancy_mlp_forward.1} parent=0 // pred_check
    _
  $region3: #{fancy_mlp_forward.1} parent=0 // pred_check_branch
    %12 = sbr.rel (0) target = $region5
  $region4: #{fancy_mlp_forward.1} parent=0 // pred_region
    _
  $region5: #{fancy_mlp_forward.1} parent=0 // pred_fallthru
    _
  // Predicated region
  $region6: #{fancy_mlp_forward.1} parent=0 // pred_check
    _
  $region7: #{fancy_mlp_forward.1} parent=0 // pred_check_branch
    %14 = sbr.rel (0) target = $region9
  $region8: #{fancy_mlp_forward.1} parent=0 // pred_region
    _
  $region9: #{fancy_mlp_forward.1} parent=0 // pred_fallthru
    _
  // Predicated region
  $region10: #{fancy_mlp_forward.1} parent=0 // pred_check
    _
  $region11: #{fancy_mlp_forward.1} parent=0 // pred_check_branch
    %16 = sbr.rel (0) target = $region13
  $region12: #{fancy_mlp_forward.1} parent=0 // pred_region
    _
  $region13: #{fancy_mlp_forward.1} parent=0 // pred_fallthru
    _
  // Predicated region
  $region14: #{fancy_mlp_forward.1} parent=0 // pred_check
    _
  $region15: #{fancy_mlp_forward.1} parent=0 // pred_check_branch
    %18 = sbr.rel (0) target = $region17
  $region16: #{fancy_mlp_forward.1} parent=0 // pred_region
    _
  $region17: #{fancy_mlp_forward.1} parent=0 // pred_fallthru
    _
  %v19 = vld [vmem:[%s1] sm:$0xff]
  %v20 = vld [vmem:[%s2] sm:$0xff]
  %v21 = vld [vmem:[%s2 + $0x8] sm:$0xff]
  %v22 = vld [vmem:[%s2 + $0x10] sm:$0xf]
  %v23 = vld [vmem:[%s3] sm:$0x1]
  %v24 = vld [vmem:[%s4] sm:$0xff]
  %v25 = vld [vmem:[%s4 + $0x8] sm:$0xff]
  %v26 = vld [vmem:[%s4 + $0x10] sm:$0xf]
  %v28 = vlaneseq
  %v29 = vshrl.u32 %v28, 7
  %v30 = vsub.s32 0, %v29
  %v31 = vrot.slane %v23, %v30
  %vm33 = vcmask 162816
  %v35 = vsel %vm33, %v19, 0
  %vm37 = vcmask 1043456
  %v39 = vsel %vm37, %v22, 0
  %41 = vmatprep.subr.mxu0 0.0
  %42 = vmatpush1.msra.mxu0 %v20
  %43 = vmatprep.subr.mxu0 0.0
  %44 = vmatpush1.msra.mxu0 %v21
  %45 = vmatprep.subr.mxu0 0.0
  %46 = vmatpush1.msra.mxu0 %v39
  %47 = vmatprep.subr.mxu0 0.0
  %48 = vmatpush1.msra.mxu0 0.0
  %49 = vmatprep.subr.mxu0 0.0
  %50 = vmatpush1.msra.mxu0 0.0
  %51 = vmatprep.subr.mxu0 0.0
  %52 = vmatpush1.msra.mxu0 0.0
  %53 = vmatprep.subr.mxu0 0.0
  %54 = vmatpush1.msra.mxu0 0.0
  %55 = vmatprep.subr.mxu0 0.0
  %56 = vmatpush1.msra.mxu0 0.0
  %57 = vmatprep.subr.mxu0 0.0
  %58 = vmatpush1.msra.mxu0 0.0
  %59 = vmatprep.subr.mxu0 0.0
  %60 = vmatpush1.msra.mxu0 0.0
  %61 = vmatprep.subr.mxu0 0.0
  %62 = vmatpush1.msra.mxu0 0.0
  %63 = vmatprep.subr.mxu0 0.0
  %64 = vmatpush1.msra.mxu0 0.0
  %65 = vmatprep.subr.mxu0 0.0
  %66 = vmatpush1.msra.mxu0 0.0
  %67 = vmatprep.subr.mxu0 0.0
  %68 = vmatpush1.msra.mxu0 0.0
  %69 = vmatprep.subr.mxu0 0.0
  %70 = vmatpush1.msra.mxu0 0.0
  %71 = vmatprep.subr.mxu0 0.0
  %72 = vmatpush1.msra.mxu0 0.0
  %73 = vmatprep.subr.mxu0 0.0
  %74 = vmatpush1.msra.mxu0 0.0
  %75 = vmatprep.subr.mxu0 0.0
  %76 = vmatpush1.msra.mxu0 0.0
  %77 = vmatprep.subr.mxu0 0.0
  %78 = vmatpush1.msra.mxu0 0.0
  %79 = vmatprep.subr.mxu0 0.0
  %80 = vmatpush1.msra.mxu0 0.0
  %81 = vmatprep.subr.mxu0 0.0
  %82 = vmatpush1.msra.mxu0 0.0
  %83 = vmatprep.subr.mxu0 0.0
  %84 = vmatpush1.msra.mxu0 0.0
  %85 = vmatprep.subr.mxu0 0.0
  %86 = vmatpush1.msra.mxu0 0.0
  %87 = vmatprep.subr.mxu0 0.0
  %88 = vmatpush1.msra.mxu0 0.0
  %89 = vmatprep.subr.mxu0 0.0
  %90 = vmatpush1.msra.mxu0 0.0
  %91 = vmatprep.subr.mxu0 0.0
  %92 = vmatpush1.msra.mxu0 0.0
  %93 = vmatprep.subr.mxu0 0.0
  %94 = vmatpush1.msra.mxu0 0.0
  %95 = vmatprep.subr.mxu0 0.0
  %96 = vmatpush1.msra.mxu0 0.0
  %97 = vmatprep.subr.mxu0 0.0
  %98 = vmatpush1.msra.mxu0 0.0
  %99 = vmatprep.subr.mxu0 0.0
  %100 = vmatpush1.msra.mxu0 0.0
  %101 = vmatprep.subr.mxu0 0.0
  %102 = vmatpush1.msra.mxu0 0.0
  %103 = vmatprep.subr.mxu0 0.0
  %104 = vmatpush1.msra.mxu0 0.0
  %105 = vmatprep.mubr.f32.mxu0 0.0
  %106 = vmatmul.mubr.f32.gmra.mrb[0].mxu0 %v35
  %v107 = vpop.f32.mrb[0].mxu0
  %v108 = vadd.f32 %v31, %v107
  %v109 = vpop.f32.mrb[0].mxu0
  %110 = vdwg.mxu0
  %v112 = vsel %vm33, %v108, 0
  %v115 = vsel %vm37, %v26, 0
  %117 = vmatprep.subr.mxu0 0.0
  %118 = vmatpush1.msra.mxu0 %v24
  %119 = vmatprep.subr.mxu0 0.0
  %120 = vmatpush1.msra.mxu0 %v25
  %121 = vmatprep.subr.mxu0 0.0
  %122 = vmatpush1.msra.mxu0 %v115
  %123 = vmatprep.subr.mxu0 0.0
  %124 = vmatpush1.msra.mxu0 0.0
  %125 = vmatprep.subr.mxu0 0.0
  %126 = vmatpush1.msra.mxu0 0.0
  %127 = vmatprep.subr.mxu0 0.0
  %128 = vmatpush1.msra.mxu0 0.0
  %129 = vmatprep.subr.mxu0 0.0
  %130 = vmatpush1.msra.mxu0 0.0
  %131 = vmatprep.subr.mxu0 0.0
  %132 = vmatpush1.msra.mxu0 0.0
  %133 = vmatprep.subr.mxu0 0.0
  %134 = vmatpush1.msra.mxu0 0.0
  %135 = vmatprep.subr.mxu0 0.0
  %136 = vmatpush1.msra.mxu0 0.0
  %137 = vmatprep.subr.mxu0 0.0
  %138 = vmatpush1.msra.mxu0 0.0
  %139 = vmatprep.subr.mxu0 0.0
  %140 = vmatpush1.msra.mxu0 0.0
  %141 = vmatprep.subr.mxu0 0.0
  %142 = vmatpush1.msra.mxu0 0.0
  %143 = vmatprep.subr.mxu0 0.0
  %144 = vmatpush1.msra.mxu0 0.0
  %145 = vmatprep.subr.mxu0 0.0
  %146 = vmatpush1.msra.mxu0 0.0
  %147 = vmatprep.subr.mxu0 0.0
  %148 = vmatpush1.msra.mxu0 0.0
  %149 = vmatprep.subr.mxu0 0.0
  %150 = vmatpush1.msra.mxu0 0.0
  %151 = vmatprep.subr.mxu0 0.0
  %152 = vmatpush1.msra.mxu0 0.0
  %153 = vmatprep.subr.mxu0 0.0
  %154 = vmatpush1.msra.mxu0 0.0
  %155 = vmatprep.subr.mxu0 0.0
  %156 = vmatpush1.msra.mxu0 0.0
  %157 = vmatprep.subr.mxu0 0.0
  %158 = vmatpush1.msra.mxu0 0.0
  %159 = vmatprep.subr.mxu0 0.0
  %160 = vmatpush1.msra.mxu0 0.0
  %161 = vmatprep.subr.mxu0 0.0
  %162 = vmatpush1.msra.mxu0 0.0
  %163 = vmatprep.subr.mxu0 0.0
  %164 = vmatpush1.msra.mxu0 0.0
  %165 = vmatprep.subr.mxu0 0.0
  %166 = vmatpush1.msra.mxu0 0.0
  %167 = vmatprep.subr.mxu0 0.0
  %168 = vmatpush1.msra.mxu0 0.0
  %169 = vmatprep.subr.mxu0 0.0
  %170 = vmatpush1.msra.mxu0 0.0
  %171 = vmatprep.subr.mxu0 0.0
  %172 = vmatpush1.msra.mxu0 0.0
  %173 = vmatprep.subr.mxu0 0.0
  %174 = vmatpush1.msra.mxu0 0.0
  %175 = vmatprep.subr.mxu0 0.0
  %176 = vmatpush1.msra.mxu0 0.0
  %177 = vmatprep.subr.mxu0 0.0
  %178 = vmatpush1.msra.mxu0 0.0
  %179 = vmatprep.subr.mxu0 0.0
  %180 = vmatpush1.msra.mxu0 0.0
  %181 = vmatprep.mubr.f32.mxu0 0.0
  %182 = vmatmul.mubr.f32.gmra.mrb[0].mxu0 %v112
  %v183 = vpop.f32.mrb[0].mxu0
  %v184 = vadd.f32 1.0, %v183
  %v185 = vpop.f32.mrb[0].mxu0
  %186 = vdwg.mxu0
  %v187 = vmax.f32 %v184, 0.0
  %v189 = vsel %vm33, %v187, 0
  %191 = vmatprep.subr.mxu0 0.0
  %192 = vmatpush1.msra.mxu0 %v20
  %193 = vmatprep.subr.mxu0 0.0
  %194 = vmatpush1.msra.mxu0 %v21
  %195 = vmatprep.subr.mxu0 0.0
  %196 = vmatpush1.msra.mxu0 %v39
  %197 = vmatprep.subr.mxu0 0.0
  %198 = vmatpush1.msra.mxu0 0.0
  %199 = vmatprep.subr.mxu0 0.0
  %200 = vmatpush1.msra.mxu0 0.0
  %201 = vmatprep.subr.mxu0 0.0
  %202 = vmatpush1.msra.mxu0 0.0
  %203 = vmatprep.subr.mxu0 0.0
  %204 = vmatpush1.msra.mxu0 0.0
  %205 = vmatprep.subr.mxu0 0.0
  %206 = vmatpush1.msra.mxu0 0.0
  %207 = vmatprep.subr.mxu0 0.0
  %208 = vmatpush1.msra.mxu0 0.0
  %209 = vmatprep.subr.mxu0 0.0
  %210 = vmatpush1.msra.mxu0 0.0
  %211 = vmatprep.subr.mxu0 0.0
  %212 = vmatpush1.msra.mxu0 0.0
  %213 = vmatprep.subr.mxu0 0.0
  %214 = vmatpush1.msra.mxu0 0.0
  %215 = vmatprep.subr.mxu0 0.0
  %216 = vmatpush1.msra.mxu0 0.0
  %217 = vmatprep.subr.mxu0 0.0
  %218 = vmatpush1.msra.mxu0 0.0
  %219 = vmatprep.subr.mxu0 0.0
  %220 = vmatpush1.msra.mxu0 0.0
  %221 = vmatprep.subr.mxu0 0.0
  %222 = vmatpush1.msra.mxu0 0.0
  %223 = vmatprep.subr.mxu0 0.0
  %224 = vmatpush1.msra.mxu0 0.0
  %225 = vmatprep.subr.mxu0 0.0
  %226 = vmatpush1.msra.mxu0 0.0
  %227 = vmatprep.subr.mxu0 0.0
  %228 = vmatpush1.msra.mxu0 0.0
  %229 = vmatprep.subr.mxu0 0.0
  %230 = vmatpush1.msra.mxu0 0.0
  %231 = vmatprep.subr.mxu0 0.0
  %232 = vmatpush1.msra.mxu0 0.0
  %233 = vmatprep.subr.mxu0 0.0
  %234 = vmatpush1.msra.mxu0 0.0
  %235 = vmatprep.subr.mxu0 0.0
  %236 = vmatpush1.msra.mxu0 0.0
  %237 = vmatprep.subr.mxu0 0.0
  %238 = vmatpush1.msra.mxu0 0.0
  %239 = vmatprep.subr.mxu0 0.0
  %240 = vmatpush1.msra.mxu0 0.0
  %241 = vmatprep.subr.mxu0 0.0
  %242 = vmatpush1.msra.mxu0 0.0
  %243 = vmatprep.subr.mxu0 0.0
  %244 = vmatpush1.msra.mxu0 0.0
  %245 = vmatprep.subr.mxu0 0.0
  %246 = vmatpush1.msra.mxu0 0.0
  %247 = vmatprep.subr.mxu0 0.0
  %248 = vmatpush1.msra.mxu0 0.0
  %249 = vmatprep.subr.mxu0 0.0
  %250 = vmatpush1.msra.mxu0 0.0
  %251 = vmatprep.subr.mxu0 0.0
  %252 = vmatpush1.msra.mxu0 0.0
  %253 = vmatprep.subr.mxu0 0.0
  %254 = vmatpush1.msra.mxu0 0.0
  %255 = vmatprep.mubr.f32.mxu0 0.0
  %256 = vmatmul.mubr.f32.gmra.mrb[0].mxu0 %v189
  %v257 = vpop.f32.mrb[0].mxu0
  %v258 = vadd.f32 %v31, %v257
  %v259 = vpop.f32.mrb[0].mxu0
  %260 = vdwg.mxu0
  %v261 = vlaneseq
  %v262 = vshrl.u32 %v261, 7
  %s263 = smul.u32 0, 8
  %v264 = vstv %s263
  %v265 = vadd.s32 %v262, %v264
  %s266 = sld [smem:[#allocation3]]
  %v267 = vstv %s266
  %vm268 = vcmp.lt.s32.totalorder %v265, %v267
  %v269 = vsel %vm268, %v258, 0.0
  %v270 = vsel %vm33, %v269, 0.0
  %271 = vadd.xlane.f32.xlu0 %v270
  %v272 = vpop.xlane.xlu0 %271
  %v273 = vrot.slane %v272, 4
  %v274 = vadd.f32 %v272, %v273
  %v275 = vrot.slane %v274, 2
  %v276 = vadd.f32 %v274, %v275
  %v277 = vrot.slane %v276, 1
  %v278 = vadd.f32 %v276, %v277
  %s279 = vtos %v278
  %v280 = vmul.f32 %v269, %v269
  %v281 = vsel %vm33, %v280, 0.0
  %282 = vadd.xlane.f32.xlu0 %v281
  %v283 = vpop.xlane.xlu0 %282
  %v284 = vrot.slane %v283, 4
  %v285 = vadd.f32 %v283, %v284
  %v286 = vrot.slane %v285, 2
  %v287 = vadd.f32 %v285, %v286
  %v288 = vrot.slane %v287, 1
  %v289 = vadd.f32 %v287, %v288
  %s290 = vtos %v289
  %vm291 = vcmp.eq.s32.totalorder %v262, 0
  %vm292 = vcmp.eq.s32.totalorder %v262, 1
  %v293 = vstv %s290
  %v294 = vsel %vm292, %v293, 0.0
  %v295 = vstv %s279
  %v296 = vsel %vm291, %v295, %v294
  %297 = vst [vmem:[%s5] sm:$0xff] %v296
  // Predicated region
  $region18: #{fancy_mlp_forward.1} parent=0 // pred_check
    _
  $region19: #{fancy_mlp_forward.1} parent=0 // pred_check_branch
    %299 = sbr.rel (0) target = $region21
  $region20: #{fancy_mlp_forward.1} parent=0 // pred_region
    _
  $region21: #{fancy_mlp_forward.1} parent=0 // pred_fallthru
    _
  // Predicated region
  $region22: #{fancy_mlp_forward.1} parent=0 // pred_check
    _
  $region23: #{fancy_mlp_forward.1} parent=0 // pred_check_branch
    %301 = sbr.rel (0) target = $region25
  $region24: #{fancy_mlp_forward.1} parent=0 // pred_region
    _
  $region25: #{fancy_mlp_forward.1} parent=0 // pred_fallthru
    _

</llo_original>
